<compile_context>
chip_gen: v6e
topology: v6e:2x2x1
jax: 0.10.0
libtpu: 0.0.40
codegen_flags: <defaults>
</compile_context>

<pallas_src>
import jax
import jax.numpy as jnp
from jax import lax
from jax.experimental import pallas as pl
from jax.experimental.pallas import tpu as pltpu


def _dwsep_kernel(x_ref, w_ref, b_ref, out_ref, stack_ref):
    # x_ref     : (B_TILE, C_in, L)           raw input block
    # w_ref     : (C_out, K*C_in)             folded depthwise(x)pointwise weights
    #                                         column = kk*C_in + i  (tap-major)
    # b_ref     : (1, C_out, 1)               folded bias (f32)
    # out_ref   : (B_TILE, C_out, L)
    # stack_ref : (B_TILE, K*C_in, L)         VMEM tap stack (compute dtype)
    b_t, c_in, l = x_ref.shape
    c_out = out_ref.shape[1]
    kc = w_ref.shape[1]
    k = kc // c_in
    pad_l = (k - 1) // 2
    cdt = stack_ref.dtype

    # Build the K 'same'-padded shifted taps once per tile, stacked along the
    # contraction axis: row kk*C_in + i holds x[:, i, t + kk - pad_l] (0 outside).
    for kk in range(k):                              # static unroll, K is tiny
        s = kk - pad_l
        lo = max(0, -s)                              # first valid output column
        hi = min(l, l - s)                           # one past last valid column
        r0, r1 = kk * c_in, (kk + 1) * c_in
        if lo > 0:
            stack_ref[:, r0:r1, :lo] = jnp.zeros((b_t, c_in, lo), cdt)
        if hi < l:
            stack_ref[:, r0:r1, hi:] = jnp.zeros((b_t, c_in, l - hi), cdt)
        if hi > lo:
            stack_ref[:, r0:r1, lo:hi] = x_ref[:, :, lo + s:hi + s].astype(cdt)

    # Exactly one MXU contraction per tile: for each batch row,
    #   (C_out, K*C_in) @ (K*C_in, L)   with f32 accumulation.
    w = jnp.broadcast_to(w_ref[...][None], (b_t, c_out, kc))
    y = lax.dot_general(
        w, stack_ref[...],
        dimension_numbers=(((2,), (1,)), ((0,), (0,))),
        preferred_element_type=jnp.float32)          # (B_TILE, C_out, L)

    out_ref[...] = (y + b_ref[...]).astype(out_ref.dtype)


def _pick_b_tile(n, c_in, c_out, l, k, in_itemsize, cd_itemsize,
                 budget_bytes=16 << 20, min_steps=8, hard_cap=32):
    """Batch-tile size: >= min_steps grid steps when N permits, VMEM-bounded."""
    per_b = (2 * c_in * l * in_itemsize              # double-buffered input block
             + 2 * c_out * l * in_itemsize           # double-buffered output block
             + k * c_in * l * cd_itemsize            # tap-stack scratch
             + c_out * l * 4                         # f32 accumulator value
             + c_out * k * c_in * cd_itemsize)       # broadcast weights
    cap_mem = max(1, budget_bytes // max(per_b, 1))
    return int(max(1, min(cap_mem, pl.cdiv(n, min_steps), hard_cap, n)))


def depthwise_separable_conv1d(x, w_dw, b_dw, w_pw, b_pw):
    """Pallas implementation matching the PyTorch module's forward pass."""
    n, c_in, l = x.shape
    c_out, cg, k = w_dw.shape
    assert cg == 1 and c_out % c_in == 0, "groups=C_in requires C_out % C_in == 0"
    mult = c_out // c_in
    assert w_pw.shape == (c_out, c_out, 1)

    # --- Fold depthwise (x) pointwise into one effective conv (tiny arrays). ---
    # Depthwise output channel o_mid = i*mult + m reads input channel i.
    hi = lax.Precision.HIGHEST
    dw2 = w_dw[:, 0, :].astype(jnp.float32)                       # (C_out, K)
    pw2 = w_pw[:, :, 0].astype(jnp.float32)                       # (C_out, C_out)
    dw3 = dw2.reshape(c_in, mult, k)                              # [i, m, kk]
    pw3 = pw2.reshape(c_out, c_in, mult)                          # [o, i, m]
    w_eff = jnp.einsum('oim,imk->oik', pw3, dw3, precision=hi)    # (C_out, C_in, K)
    # tap-major flatten: column kk*C_in + i  (matches the in-kernel tap stack)
    w_flat = jnp.transpose(w_eff, (0, 2, 1)).reshape(c_out, k * c_in)
    b_eff = (jnp.einsum('oc,c->o', pw2, b_dw.astype(jnp.float32), precision=hi)
             + b_pw.astype(jnp.float32)).reshape(1, c_out, 1)

    # bf16 MXU operands when the input is bf16 (f32 accumulate), f32 otherwise.
    compute_dtype = jnp.bfloat16 if x.dtype == jnp.bfloat16 else jnp.float32
    w_flat = w_flat.astype(compute_dtype)

    in_item = jnp.dtype(x.dtype).itemsize
    cd_item = jnp.dtype(compute_dtype).itemsize
    b_tile = _pick_b_tile(n, c_in, c_out, l, k, in_item, cd_item)
    grid = (pl.cdiv(n, b_tile),)                      # tail block masked by Pallas

    # Real VMEM footprint (+ headroom), capped at 48 MiB so it is v7x-safe.
    vmem_bytes = (2 * b_tile * c_in * l * in_item
                  + 2 * b_tile * c_out * l * in_item
                  + b_tile * k * c_in * l * cd_item
                  + b_tile * c_out * l * 4
                  + b_tile * c_out * k * c_in * cd_item
                  + 2 * (c_out * k * c_in + c_out) * 4)
    vmem_limit = int(min(48 << 20, max(vmem_bytes + (8 << 20), 16 << 20)))

    return pl.pallas_call(
        _dwsep_kernel,
        out_shape=jax.ShapeDtypeStruct((n, c_out, l), x.dtype),
        grid_spec=pltpu.PrefetchScalarGridSpec(
            num_scalar_prefetch=0,
            grid=grid,
            in_specs=[
                pl.BlockSpec((b_tile, c_in, l), lambda i: (i, 0, 0)),
                pl.BlockSpec((c_out, k * c_in), lambda i: (0, 0)),
                pl.BlockSpec((1, c_out, 1), lambda i: (0, 0, 0)),
            ],
            out_specs=pl.BlockSpec((b_tile, c_out, l), lambda i: (i, 0, 0)),
            scratch_shapes=[pltpu.VMEM((b_tile, k * c_in, l), compute_dtype)],
        ),
        compiler_params=pltpu.CompilerParams(
            dimension_semantics=("parallel",),
            vmem_limit_bytes=vmem_limit),
    )(x, w_flat, b_eff)


def _reference(x, w_dw, b_dw, w_pw, b_pw):
    """Pure-JAX reference (mirrors PyTorch Conv1d semantics)."""
    c_in = x.shape[1]
    dw = lax.conv_general_dilated(
        x, w_dw, window_strides=(1,), padding="SAME",
        dimension_numbers=("NCH", "OIH", "NCH"),
        feature_group_count=c_in) + b_dw[None, :, None]
    pw = lax.conv_general_dilated(
        dw, w_pw, window_strides=(1,), padding="SAME",
        dimension_numbers=("NCH", "OIH", "NCH")) + b_pw[None, :, None]
    return pw


if __name__ == "__main__":
    # Small shapes consistent with the module: Conv1d on (N, C, L).
    N, C_IN, C_OUT, L, K = 2, 4, 8, 16, 5

    key = jax.random.PRNGKey(0)
    kx, k1, k2, k3, k4 = jax.random.split(key, 5)

    x = jax.random.normal(kx, (N, C_IN, L), dtype=jnp.float32)

    # Deterministic synthetic parameters (PyTorch-like uniform fan-in scale).
    s_dw = 1.0 / jnp.sqrt(jnp.float32(1 * K))        # depthwise: C_in/groups = 1
    s_pw = 1.0 / jnp.sqrt(jnp.float32(C_OUT * 1))
    w_dw = jax.random.uniform(k1, (C_OUT, 1, K), jnp.float32, -s_dw, s_dw)
    b_dw = jax.random.uniform(k2, (C_OUT,), jnp.float32, -s_dw, s_dw)
    w_pw = jax.random.uniform(k3, (C_OUT, C_OUT, 1), jnp.float32, -s_pw, s_pw)
    b_pw = jax.random.uniform(k4, (C_OUT,), jnp.float32, -s_pw, s_pw)

    out = depthwise_separable_conv1d(x, w_dw, b_dw, w_pw, b_pw)
    out = jax.block_until_ready(out)

    ref = _reference(x, w_dw, b_dw, w_pw, b_pw)
    assert out.shape == (N, C_OUT, L)
    assert jnp.allclose(out, ref, atol=1e-5, rtol=1e-5), "mismatch vs reference"

    print("KERNEL_OK")
</pallas_src>

<mosaic_0001>
module attributes {stable_mosaic.version = 11 : i64} {
  func.func @_dwsep_kernel(%arg0: i32, %arg1: memref<1x4x16xf32, #tpu.memory_space<vmem>>, %arg2: memref<8x20xf32, #tpu.memory_space<vmem>>, %arg3: memref<1x8x1xf32, #tpu.memory_space<vmem>>, %arg4: memref<1x8x16xf32, #tpu.memory_space<vmem>>, %arg5: memref<1x20x16xf32, #tpu.memory_space<vmem>>) attributes {dimension_semantics = [#tpu.dimension_semantics<parallel>], iteration_bounds = array<i64: 2>, scalar_prefetch = 0 : i64, scratch_operands = 1 : i64, tpu.core_type = #tpu.core_type<tc>, window_params = [{transform_indices = @transform_0, window_bounds = array<i64: 1, 4, 16>}, {pipeline_mode = #tpu.pipeline_mode<synchronous>, transform_indices = @transform_1, window_bounds = array<i64: 8, 20>}, {pipeline_mode = #tpu.pipeline_mode<synchronous>, transform_indices = @transform_2, window_bounds = array<i64: 1, 8, 1>}, {transform_indices = @transform_3, window_bounds = array<i64: 1, 8, 16>}]} {
    %cst = arith.constant 0.000000e+00 : f32
    %0 = vector.broadcast %cst : f32 to vector<1x4x2xf32>
    %c0 = arith.constant 0 : index
    %c0_0 = arith.constant 0 : index
    %c0_1 = arith.constant 0 : index
    %1 = vector.load %arg5[%c0, %c0_0, %c0_1] : memref<1x20x16xf32, #tpu.memory_space<vmem>>, vector<1x4x2xf32>
    tpu.vector_store %arg5[%c0, %c0_0, %c0_1], %0 {strides = array<i32>} : memref<1x20x16xf32, #tpu.memory_space<vmem>>, vector<1x4x2xf32>,
    %c0_2 = arith.constant 0 : index
    %c0_3 = arith.constant 0 : index
    %c0_4 = arith.constant 0 : index
    %2 = vector.load %arg1[%c0_2, %c0_3, %c0_4] : memref<1x4x16xf32, #tpu.memory_space<vmem>>, vector<1x4x14xf32>
    %c0_5 = arith.constant 0 : index
    %c0_6 = arith.constant 0 : index
    %c2 = arith.constant 2 : index
    %3 = vector.load %arg5[%c0_5, %c0_6, %c2] : memref<1x20x16xf32, #tpu.memory_space<vmem>>, vector<1x4x14xf32>
    tpu.vector_store %arg5[%c0_5, %c0_6, %c2], %2 {strides = array<i32>} : memref<1x20x16xf32, #tpu.memory_space<vmem>>, vector<1x4x14xf32>,
    %cst_7 = arith.constant 0.000000e+00 : f32
    %4 = vector.broadcast %cst_7 : f32 to vector<1x4x1xf32>
    %c0_8 = arith.constant 0 : index
    %c4 = arith.constant 4 : index
    %c0_9 = arith.constant 0 : index
    %5 = vector.load %arg5[%c0_8, %c4, %c0_9] : memref<1x20x16xf32, #tpu.memory_space<vmem>>, vector<1x4x1xf32>
    tpu.vector_store %arg5[%c0_8, %c4, %c0_9], %4 {strides = array<i32>} : memref<1x20x16xf32, #tpu.memory_space<vmem>>, vector<1x4x1xf32>,
    %c0_10 = arith.constant 0 : index
    %c0_11 = arith.constant 0 : index
    %c0_12 = arith.constant 0 : index
    %6 = vector.load %arg1[%c0_10, %c0_11, %c0_12] : memref<1x4x16xf32, #tpu.memory_space<vmem>>, vector<1x4x15xf32>
    %c0_13 = arith.constant 0 : index
    %c4_14 = arith.constant 4 : index
    %c1 = arith.constant 1 : index
    %7 = vector.load %arg5[%c0_13, %c4_14, %c1] : memref<1x20x16xf32, #tpu.memory_space<vmem>>, vector<1x4x15xf32>
    tpu.vector_store %arg5[%c0_13, %c4_14, %c1], %6 {strides = array<i32>} : memref<1x20x16xf32, #tpu.memory_space<vmem>>, vector<1x4x15xf32>,
    %c0_15 = arith.constant 0 : index
    %c0_16 = arith.constant 0 : index
    %c0_17 = arith.constant 0 : index
    %8 = vector.load %arg1[%c0_15, %c0_16, %c0_17] : memref<1x4x16xf32, #tpu.memory_space<vmem>>, vector<1x4x16xf32>
    %c0_18 = arith.constant 0 : index
    %c8 = arith.constant 8 : index
    %c0_19 = arith.constant 0 : index
    %9 = vector.load %arg5[%c0_18, %c8, %c0_19] : memref<1x20x16xf32, #tpu.memory_space<vmem>>, vector<1x4x16xf32>
    tpu.vector_store %arg5[%c0_18, %c8, %c0_19], %8 {strides = array<i32>} : memref<1x20x16xf32, #tpu.memory_space<vmem>>, vector<1x4x16xf32>,
    %cst_20 = arith.constant 0.000000e+00 : f32
    %10 = vector.broadcast %cst_20 : f32 to vector<1x4x1xf32>
    %c0_21 = arith.constant 0 : index
    %c12 = arith.constant 12 : index
    %c15 = arith.constant 15 : index
    %11 = vector.load %arg5[%c0_21, %c12, %c15] : memref<1x20x16xf32, #tpu.memory_space<vmem>>, vector<1x4x1xf32>
    tpu.vector_store %arg5[%c0_21, %c12, %c15], %10 {strides = array<i32>} : memref<1x20x16xf32, #tpu.memory_space<vmem>>, vector<1x4x1xf32>,
    %c0_22 = arith.constant 0 : index
    %c0_23 = arith.constant 0 : index
    %c1_24 = arith.constant 1 : index
    %12 = vector.load %arg1[%c0_22, %c0_23, %c1_24] : memref<1x4x16xf32, #tpu.memory_space<vmem>>, vector<1x4x15xf32>
    %c0_25 = arith.constant 0 : index
    %c12_26 = arith.constant 12 : index
    %c0_27 = arith.constant 0 : index
    %13 = vector.load %arg5[%c0_25, %c12_26, %c0_27] : memref<1x20x16xf32, #tpu.memory_space<vmem>>, vector<1x4x15xf32>
    tpu.vector_store %arg5[%c0_25, %c12_26, %c0_27], %12 {strides = array<i32>} : memref<1x20x16xf32, #tpu.memory_space<vmem>>, vector<1x4x15xf32>,
    %cst_28 = arith.constant 0.000000e+00 : f32
    %14 = vector.broadcast %cst_28 : f32 to vector<1x4x2xf32>
    %c0_29 = arith.constant 0 : index
    %c16 = arith.constant 16 : index
    %c14 = arith.constant 14 : index
    %15 = vector.load %arg5[%c0_29, %c16, %c14] : memref<1x20x16xf32, #tpu.memory_space<vmem>>, vector<1x4x2xf32>
    tpu.vector_store %arg5[%c0_29, %c16, %c14], %14 {strides = array<i32>} : memref<1x20x16xf32, #tpu.memory_space<vmem>>, vector<1x4x2xf32>,
    %c0_30 = arith.constant 0 : index
    %c0_31 = arith.constant 0 : index
    %c2_32 = arith.constant 2 : index
    %16 = vector.load %arg1[%c0_30, %c0_31, %c2_32] : memref<1x4x16xf32, #tpu.memory_space<vmem>>, vector<1x4x14xf32>
    %c0_33 = arith.constant 0 : index
    %c16_34 = arith.constant 16 : index
    %c0_35 = arith.constant 0 : index
    %17 = vector.load %arg5[%c0_33, %c16_34, %c0_35] : memref<1x20x16xf32, #tpu.memory_space<vmem>>, vector<1x4x14xf32>
    tpu.vector_store %arg5[%c0_33, %c16_34, %c0_35], %16 {strides = array<i32>} : memref<1x20x16xf32, #tpu.memory_space<vmem>>, vector<1x4x14xf32>,
    %c0_36 = arith.constant 0 : index
    %c0_37 = arith.constant 0 : index
    %18 = vector.load %arg2[%c0_36, %c0_37] : memref<8x20xf32, #tpu.memory_space<vmem>>, vector<8x20xf32>
    %19 = vector.shape_cast %18 : vector<8x20xf32> to vector<1x8x20xf32>
    %c0_38 = arith.constant 0 : index
    %c0_39 = arith.constant 0 : index
    %c0_40 = arith.constant 0 : index
    %20 = vector.load %arg5[%c0_38, %c0_39, %c0_40] : memref<1x20x16xf32, #tpu.memory_space<vmem>>, vector<1x20x16xf32>
    %cst_41 = arith.constant dense<0.000000e+00> : vector<1x8x16xf32>
    %21 = tpu.matmul %19, %20, %cst_41 {dimension_numbers = #tpu.dot_dimension_numbers<[2], [1], [1], [2], [0, 0, 0, 1, 1, 2], [0], [0]>} : vector<1x8x20xf32>, vector<1x20x16xf32>, vector<1x8x16xf32> -> vector<1x8x16xf32>
    %c0_42 = arith.constant 0 : index
    %c0_43 = arith.constant 0 : index
    %c0_44 = arith.constant 0 : index
    %22 = vector.load %arg3[%c0_42, %c0_43, %c0_44] : memref<1x8x1xf32, #tpu.memory_space<vmem>>, vector<1x8x1xf32>
    %23 = vector.broadcast %22 : vector<1x8x1xf32> to vector<1x8x16xf32>
    %24 = arith.addf %21, %23 : vector<1x8x16xf32>
    %c0_45 = arith.constant 0 : index
    %c0_46 = arith.constant 0 : index
    %c0_47 = arith.constant 0 : index
    %25 = vector.load %arg4[%c0_45, %c0_46, %c0_47] : memref<1x8x16xf32, #tpu.memory_space<vmem>>, vector<1x8x16xf32>
    tpu.vector_store %arg4[%c0_45, %c0_46, %c0_47], %24 {strides = array<i32>} : memref<1x8x16xf32, #tpu.memory_space<vmem>>, vector<1x8x16xf32>,
    return
  }
  func.func @transform_0(%arg0: i32) -> (i32, i32, i32) {
    %c0_i32 = arith.constant 0 : i32
    %c0_i32_0 = arith.constant 0 : i32
    %c0_i32_1 = arith.constant 0 : i32
    return %arg0, %c0_i32, %c0_i32_0 : i32, i32, i32
  }
  func.func @transform_1(%arg0: i32) -> (i32, i32) {
    %c0_i32 = arith.constant 0 : i32
    %c0_i32_0 = arith.constant 0 : i32
    %c0_i32_1 = arith.constant 0 : i32
    return %c0_i32, %c0_i32_0 : i32, i32
  }
  func.func @transform_2(%arg0: i32) -> (i32, i32, i32) {
    %c0_i32 = arith.constant 0 : i32
    %c0_i32_0 = arith.constant 0 : i32
    %c0_i32_1 = arith.constant 0 : i32
    %c0_i32_2 = arith.constant 0 : i32
    return %c0_i32, %c0_i32_0, %c0_i32_1 : i32, i32, i32
  }
  func.func @transform_3(%arg0: i32) -> (i32, i32, i32) {
    %c0_i32 = arith.constant 0 : i32
    %c0_i32_0 = arith.constant 0 : i32
    %c0_i32_1 = arith.constant 0 : i32
    return %arg0, %c0_i32, %c0_i32_0 : i32, i32, i32
  }
}

</mosaic_0001>

<llo_original>
// kernel: tpu_custom_call.1
$region0: #{tpu_custom_call.1}
  #allocation0 [shape = 'u32[]', space=smem, size = 0x4, offset = 0x4, fixed_abs, tag = 'smem constant byte address 0x4 - core index']
  #allocation1 [shape = 'u32[144,128]{1,0:T(1,128)}', space=vmem, size = 0x12000, scoped, tag = 'internal scratch']
  #allocation2 [shape = 'f32[1,20,16]{2,1,0:T(8,128)}', space=vmem, size = 0x3000, scoped, tag = 'scratch operand']
  %s0 = inlined_call_operand.vmem [shape: f32[2,4,16], index: 0, kind: input, shape index: {}]
  %s1 = inlined_call_operand.hbm [shape: f32[8,20], index: 1, kind: input, shape index: {}]
  %s2 = inlined_call_operand.vmem [shape: f32[1,8,1], index: 2, kind: input, shape index: {}]
  %s3 = inlined_call_operand.hbm [shape: f32[2,8,16], index: 3, kind: output, shape index: {}]
  %s4 = sld [smem:[#allocation0]]
  $region49: #{tpu_custom_call.1} parent=0
    _
  %s6 = ssub.s32 1, %s4
  %s7 = scalar_select 0, %s6, %s4
  $region1: #{tpu_custom_call.1} parent=0
    #allocation3 [shape = 'u8[4096]{0}', space=vmem, size = 0x1000, scoped, tag = 'input window, operand 1, single buffered']
    #allocation4 [shape = 's32[2]{0}', space=sflag, size = 0x8, scoped, tag = 'scoped memory for tpu_custom_call.1']
    #allocation5 [shape = 's32[2]{0}', space=sflag, size = 0x8, scoped, tag = 'scoped memory for tpu_custom_call.1']
    #allocation6 [shape = 'u8[8192]{0}', space=vmem, size = 0x2000, scoped, tag = 'output window, operand 0']
    %8 = vsyncpa [#allocation4], 0
    %9 = vsyncpa [#allocation5], 0
    %s10 = scalar_lea.sflag [#allocation5], 1
    %11 = vsyncpa %s10, 0
    loop: start=0, step=1, limit=4
    $region2: #{tpu_custom_call.1} parent=1 // loop_pre_header
      _
    $region3: #{tpu_custom_call.1} parent=1 // loop_header
      %s13 = sphi 0, %s17
      %p14 = scmp.ge.s32.totalorder %s13, 4
      %s23 = sphi 0, %s25
      %s26 = sphi 0, %s23
      %s27 = sphi 0, %s26
      %s43 = sphi 0, %s27
      %s47 = sphi 0, %s47
      %s49 = sphi 0, %s47
      %s50 = sphi 0, %s49
      %s64 = sphi 0, %s50
      %s68 = sphi 0, %s68
      %s70 = sphi 0, %s68
      %s71 = sphi 0, %s70
      %s85 = sphi 0, %s71
      %s91 = sphi 0, %s93
      %s94 = sphi 0, %s91
      %s95 = sphi 0, %s94
      %s111 = sphi 0, %s95
    $region4: #{tpu_custom_call.1} parent=1 // loop_header_branch
      %16 = sbr.rel (%p14) target = $region8
    $region5: #{tpu_custom_call.1} parent=1 // loop_body
      %s18 = ssub.s32 %s13, 1
      %s19 = ssub.s32 %s13, 2
      %s20 = sadd.s32 %s13, 1
      %s21 = ssub.s32 %s13, %s20
      %p22 = scmp.eq.s32.totalorder %s21, 0
      %s24 = sadd.s32 %s23, 1
      %s25 = scalar_select %p22, %s23, %s24
      %p28 = pneg %p22
      %p29 = scmp.eq.s32.totalorder %s13, 1
      %p30 = por %p28, %p29
      %p31 = scmp.ne.s32.totalorder %s23, %s26
      %p32 = scmp.eq.s32.totalorder %s13, 0
      %p33 = por %p31, %p32
      %p34 = scmp.ne.s32.totalorder %s23, %s26
      %p35 = scmp.eq.s32.totalorder %s18, 1
      %p36 = por %p34, %p35
      %p37 = scmp.ne.s32.totalorder %s26, %s27
      %p38 = scmp.eq.s32.totalorder %s18, 0
      %p39 = por %p37, %p38
      %p40 = scmp.ne.s32.totalorder %s26, %s27
      %p41 = scmp.eq.s32.totalorder %s19, 1
      %p42 = por %p40, %p41
      %p44 = scmp.ne.s32.totalorder %s27, %s43
      %p45 = scmp.eq.s32.totalorder %s19, 0
      %p46 = por %p44, %p45
      %s48 = sadd.s32 %s47, 1
      %p51 = scmp.eq.s32.totalorder %s13, 1
      %p52 = scmp.ne.s32.totalorder %s47, %s49
      %p53 = scmp.eq.s32.totalorder %s13, 0
      %p54 = por %p52, %p53
      %p55 = scmp.ne.s32.totalorder %s47, %s49
      %p56 = scmp.eq.s32.totalorder %s18, 1
      %p57 = por %p55, %p56
      %p58 = scmp.ne.s32.totalorder %s49, %s50
      %p59 = scmp.eq.s32.totalorder %s18, 0
      %p60 = por %p58, %p59
      %p61 = scmp.ne.s32.totalorder %s49, %s50
      %p62 = scmp.eq.s32.totalorder %s19, 1
      %p63 = por %p61, %p62
      %p65 = scmp.ne.s32.totalorder %s50, %s64
      %p66 = scmp.eq.s32.totalorder %s19, 0
      %p67 = por %p65, %p66
      %s69 = sadd.s32 %s68, 1
      %p72 = scmp.eq.s32.totalorder %s13, 1
      %p73 = scmp.ne.s32.totalorder %s68, %s70
      %p74 = scmp.eq.s32.totalorder %s13, 0
      %p75 = por %p73, %p74
      %p76 = scmp.ne.s32.totalorder %s68, %s70
      %p77 = scmp.eq.s32.totalorder %s18, 1
      %p78 = por %p76, %p77
      %p79 = scmp.ne.s32.totalorder %s70, %s71
      %p80 = scmp.eq.s32.totalorder %s18, 0
      %p81 = por %p79, %p80
      %p82 = scmp.ne.s32.totalorder %s70, %s71
      %p83 = scmp.eq.s32.totalorder %s19, 1
      %p84 = por %p82, %p83
      %p86 = scmp.ne.s32.totalorder %s71, %s85
      %p87 = scmp.eq.s32.totalorder %s19, 0
      %p88 = por %p86, %p87
      %s89 = ssub.s32 %s13, %s20
      %p90 = scmp.eq.s32.totalorder %s89, 0
      %s92 = sadd.s32 %s91, 1
      %s93 = scalar_select %p90, %s91, %s92
      %p96 = pneg %p90
      %p97 = scmp.eq.s32.totalorder %s13, 1
      %p98 = por %p96, %p97
      %p99 = scmp.ne.s32.totalorder %s91, %s94
      %p100 = scmp.eq.s32.totalorder %s13, 0
      %p101 = por %p99, %p100
      %p102 = scmp.ne.s32.totalorder %s91, %s94
      %p103 = scmp.eq.s32.totalorder %s18, 1
      %p104 = por %p102, %p103
      %p105 = scmp.ne.s32.totalorder %s94, %s95
      %p106 = scmp.eq.s32.totalorder %s18, 0
      %p107 = por %p105, %p106
      %p108 = scmp.ne.s32.totalorder %s94, %s95
      %p109 = scmp.eq.s32.totalorder %s19, 1
      %p110 = por %p108, %p109
      %p112 = scmp.ne.s32.totalorder %s95, %s111
      %p113 = scmp.eq.s32.totalorder %s19, 0
      %p114 = por %p112, %p113
      %p115 = scmp.le.s32.totalorder 1, %s13
      %p116 = scmp.lt.s32.totalorder %s13, 3
      %p117 = pnand %p115, %p116
      %p118 = pneg %p117
      // Predicated region
      $region9: #{tpu_custom_call.1} parent=5 // pred_check
        _
      $region10: #{tpu_custom_call.1} parent=5 // pred_check_branch
        %120 = sbr.rel (%p117) target = $region12
      $region11: #{tpu_custom_call.1} parent=5 // pred_region
        %s121 = ssub.s32 %s13, 1
        // Predicated region
        $region13: #{tpu_custom_call.1} parent=11 // pred_check
          %p122 = pneg %p60
        $region14: #{tpu_custom_call.1} parent=11 // pred_check_branch
          %124 = sbr.rel (%p122) target = $region16
        $region15: #{tpu_custom_call.1} parent=11 // pred_region
          %s126 = ssub.s32 128, 128
          %127 = vsyncadd [#allocation4], %s126
          %s129 = sshll.u32 [#allocation3], 4
          %s130 = int_to_ptr.vmem [resolvable:$true] %s129
          %132 = dma.hbm_to_vmem [thread:$0]  %s1, 128, %s130, [#allocation4]
        $region16: #{tpu_custom_call.1} parent=11 // pred_fallthru
          _
        // Predicated region
        $region17: #{tpu_custom_call.1} parent=11 // pred_check
          %p133 = pneg %p81
        $region18: #{tpu_custom_call.1} parent=11 // pred_check_branch
          %135 = sbr.rel (%p133) target = $region20
        $region19: #{tpu_custom_call.1} parent=11 // pred_region
          _
        $region20: #{tpu_custom_call.1} parent=11 // pred_fallthru
          _
      $region12: #{tpu_custom_call.1} parent=5 // pred_fallthru
        _
      %p136 = scmp.lt.s32.totalorder %s13, 2
      // Predicated region
      $region21: #{tpu_custom_call.1} parent=5 // pred_check
        %p137 = pneg %p136
      $region22: #{tpu_custom_call.1} parent=5 // pred_check_branch
        %139 = sbr.rel (%p137) target = $region24
      $region23: #{tpu_custom_call.1} parent=5 // pred_region
        // Predicated region
        $region25: #{tpu_custom_call.1} parent=23 // pred_check
          %p140 = pneg %p33
        $region26: #{tpu_custom_call.1} parent=23 // pred_check_branch
          %142 = sbr.rel (%p140) target = $region28
        $region27: #{tpu_custom_call.1} parent=23 // pred_region
          %p143 = scmp.lt.s32.totalorder %s13, 1
          %s144 = scalar_select %p143, %s13, 1
          %s145 = smul.addr %s144, 4
          %s146 = scalar_lea.vmem %s0, %s145
        $region28: #{tpu_custom_call.1} parent=23 // pred_fallthru
          _
      $region24: #{tpu_custom_call.1} parent=5 // pred_fallthru
        _
      %p147 = scmp.le.s32.totalorder 1, %s13
      %p148 = scmp.lt.s32.totalorder %s13, 3
      %p149 = pnand %p147, %p148
      %p150 = pneg %p149
      // Predicated region
      $region29: #{tpu_custom_call.1} parent=5 // pred_check
        _
      $region30: #{tpu_custom_call.1} parent=5 // pred_check_branch
        %152 = sbr.rel (%p149) target = $region32
      $region31: #{tpu_custom_call.1} parent=5 // pred_region
        %s153 = ssub.s32 %s13, 1
        // Predicated region
        $region33: #{tpu_custom_call.1} parent=31 // pred_check
          %p154 = pneg %p60
        $region34: #{tpu_custom_call.1} parent=31 // pred_check_branch
          %156 = sbr.rel (%p154) target = $region36
        $region35: #{tpu_custom_call.1} parent=31 // pred_region
          %157 = dma.done [#allocation4], 128
        $region36: #{tpu_custom_call.1} parent=31 // pred_fallthru
          _
        %p158 = scmp.lt.s32.totalorder %s18, 1
        %s159 = scalar_select %p158, %s18, 1
        %s160 = smul.addr %s159, 4
        %s161 = scalar_lea.vmem %s0, %s160
        %p162 = pneg %p39
        %p163 = pneg %p36
        %p164 = pneg %p60
        %p165 = pneg %p57
        %p166 = pneg %p81
        %p167 = pneg %p78
        %p168 = pneg %p107
        %p169 = pneg %p104
        %s170 = sand.u32 %s94, 1
        %s171 = scalar_lea.sflag [#allocation5], %s170
        %s172 = sand.u32 %s94, 1
        %s173 = smul.addr %s172, 8
        %s174 = scalar_lea.vmem [#allocation6], %s173
        %p175 = scmp.lt.s32.totalorder %s18, 1
        %s176 = scalar_select %p175, %s18, 1
        %s177 = smul.addr %s176, 4
        %s178 = scalar_lea.vmem %s0, %s177
        %vm179 = vcmask 11264
        %180 = vst.msk [vmem:[#allocation2] sm:$0xf] %vm179, 0.0
        %v181 = vld [vmem:[%s178] sm:$0xf]
        %183 = vrot.lane.b32.xlu0 %v181, 2
        %v184 = vpop.permute.xlu0 %183
        %vm186 = vcmask 125968
        %187 = vst.msk [vmem:[#allocation2] sm:$0xf] %vm186, %v184
        %vm188 = vcmask 3072
        %189 = vst.msk [vmem:[#allocation2 + $0x4] sm:$0xf] %vm188, 0.0
        %v190 = vld [vmem:[%s178] sm:$0xf]
        %192 = vrot.lane.b32.xlu0 %v190, 1
        %v193 = vpop.permute.xlu0 %192
        %vm195 = vcmask 125960
        %196 = vst.msk [vmem:[#allocation2 + $0x4] sm:$0xf] %vm195, %v193
        %v197 = vld [vmem:[%s178] sm:$0xf]
        %vm198 = vcmask 125952
        %199 = vst.msk [vmem:[#allocation2 + $0x8] sm:$0xf] %vm198, %v197
        %vm200 = vcmask 126072
        %201 = vst.msk [vmem:[#allocation2 + $0xc] sm:$0xf] %vm200, 0.0
        %v202 = vld [vmem:[%s178] sm:$0xf]
        %204 = vrot.lane.b32.xlu0 %v202, 127
        %v205 = vpop.permute.xlu0 %204
        %vm207 = vcmask 117760
        %208 = vst.msk [vmem:[#allocation2 + $0xc] sm:$0xf] %vm207, %v205
        %vm209 = vcmask 126064
        %210 = vst.msk [vmem:[#allocation2 + $0x10] sm:$0xf] %vm209, 0.0
        %v211 = vld [vmem:[%s178] sm:$0xf]
        %213 = vrot.lane.b32.xlu0 %v211, 126
        %v214 = vpop.permute.xlu0 %213
        %vm216 = vcmask 109568
        %217 = vst.msk [vmem:[#allocation2 + $0x10] sm:$0xf] %vm216, %v214
        %v218 = vld [vmem:[#allocation3] sm:$0xff]
        %v219 = vld [vmem:[#allocation2] sm:$0xff]
        %v220 = vld [vmem:[#allocation2 + $0x8] sm:$0xff]
        %v221 = vld [vmem:[#allocation2 + $0x10] sm:$0xf]
        %v222 = vld [vmem:[%s2] sm:$0xff]
        %224 = vset.pattern.permute.xlu0 0
        %225 = vperm.xlu0 %224, %v222
        %v226 = vpop.permute.xlu0 %225
        %vm228 = vcmask 162816
        %v230 = vsel %vm228, %v218, 0
        %vm232 = vcmask 1043456
        %v234 = vsel %vm232, %v221, 0
        %236 = vmatprep.subr.mxu0 0.0
        %237 = vmatpush1.msra.mxu0 0.0
        %238 = vmatprep.subr.mxu0 0.0
        %239 = vmatpush1.msra.mxu0 0.0
        %240 = vmatprep.subr.mxu0 0.0
        %241 = vmatpush1.msra.mxu0 0.0
        %242 = vmatprep.subr.mxu0 0.0
        %243 = vmatpush1.msra.mxu0 0.0
        %244 = vmatprep.subr.mxu0 0.0
        %245 = vmatpush1.msra.mxu0 0.0
        %246 = vmatprep.subr.mxu0 0.0
        %247 = vmatpush1.msra.mxu0 0.0
        %248 = vmatprep.subr.mxu0 0.0
        %249 = vmatpush1.msra.mxu0 0.0
        %250 = vmatprep.subr.mxu0 0.0
        %251 = vmatpush1.msra.mxu0 0.0
        %252 = vmatprep.subr.mxu0 0.0
        %253 = vmatpush1.msra.mxu0 0.0
        %254 = vmatprep.subr.mxu0 0.0
        %255 = vmatpush1.msra.mxu0 0.0
        %256 = vmatprep.subr.mxu0 0.0
        %257 = vmatpush1.msra.mxu0 0.0
        %258 = vmatprep.subr.mxu0 0.0
        %259 = vmatpush1.msra.mxu0 0.0
        %260 = vmatprep.subr.mxu0 0.0
        %261 = vmatpush1.msra.mxu0 0.0
        %262 = vmatprep.subr.mxu0 0.0
        %263 = vmatpush1.msra.mxu0 %v234
        %264 = vmatprep.subr.mxu0 0.0
        %265 = vmatpush1.msra.mxu0 %v220
        %266 = vmatprep.subr.mxu0 0.0
        %267 = vmatpush1.msra.mxu0 %v219
        %268 = vmatprep.subr.mxu0 0.0
        %269 = vmatpush2.msra.mxu0 0.0
        %270 = vmatprep.subr.mxu0 0.0
        %271 = vmatpush2.msra.mxu0 0.0
        %272 = vmatprep.subr.mxu0 0.0
        %273 = vmatpush2.msra.mxu0 0.0
        %274 = vmatprep.subr.mxu0 0.0
        %275 = vmatpush2.msra.mxu0 0.0
        %276 = vmatprep.subr.mxu0 0.0
        %277 = vmatpush2.msra.mxu0 0.0
        %278 = vmatprep.subr.mxu0 0.0
        %279 = vmatpush2.msra.mxu0 0.0
        %280 = vmatprep.subr.mxu0 0.0
        %281 = vmatpush2.msra.mxu0 0.0
        %282 = vmatprep.subr.mxu0 0.0
        %283 = vmatpush2.msra.mxu0 0.0
        %284 = vmatprep.subr.mxu0 0.0
        %285 = vmatpush2.msra.mxu0 0.0
        %286 = vmatprep.subr.mxu0 0.0
        %287 = vmatpush2.msra.mxu0 0.0
        %288 = vmatprep.subr.mxu0 0.0
        %289 = vmatpush2.msra.mxu0 0.0
        %290 = vmatprep.subr.mxu0 0.0
        %291 = vmatpush2.msra.mxu0 0.0
        %292 = vmatprep.subr.mxu0 0.0
        %293 = vmatpush2.msra.mxu0 0.0
        %294 = vmatprep.subr.mxu0 0.0
        %295 = vmatpush2.msra.mxu0 0.0
        %296 = vmatprep.subr.mxu0 0.0
        %297 = vmatpush2.msra.mxu0 0.0
        %298 = vmatprep.subr.mxu0 0.0
        %299 = vmatpush2.msra.mxu0 0.0
        %300 = vmatprep.mubr.f32.mxu0 0.0
        %301 = vmatmul.mubr.f32.gmra.mxu0 %v230
        %v302 = vpop.f32.mrf.mxu0
        %v303 = vadd.f32 %v226, %v302
        %v304 = vpop.f32.mrf.mxu0
        %305 = vdwg.mxu0
        %vm306 = vcmask 130048
        %307 = vst.msk [vmem:[%s174] sm:$0xff] %vm306, %v303
        %s308 = sand.u32 %s94, 1
        %s309 = scalar_lea.sflag [#allocation5], %s308
        %s310 = sand.u32 %s94, 1
        %s311 = smul.addr %s310, 8
        %s312 = scalar_lea.vmem [#allocation6], %s311
        // Predicated region
        $region37: #{tpu_custom_call.1} parent=31 // pred_check
          %p313 = pneg %p104
        $region38: #{tpu_custom_call.1} parent=31 // pred_check_branch
          %315 = sbr.rel (%p313) target = $region40
        $region39: #{tpu_custom_call.1} parent=31 // pred_region
          %s317 = ssub.s32 128, 128
          %318 = vsyncadd %s309, %s317
          %s319 = smul.addr %s18, 128
          %s320 = scalar_lea.hbm %s3, %s319
          %s322 = sshll.u32 %s312, 4
          %s323 = int_to_ptr.vmem [resolvable:$true] %s322
          %325 = dma.vmem_to_hbm [thread:$0]  %s323, 128, %s320, %s309
        $region40: #{tpu_custom_call.1} parent=31 // pred_fallthru
          _
      $region32: #{tpu_custom_call.1} parent=5 // pred_fallthru
        _
      %p326 = scmp.le.s32.totalorder 2, %s13
      // Predicated region
      $region41: #{tpu_custom_call.1} parent=5 // pred_check
        %p327 = pneg %p326
      $region42: #{tpu_custom_call.1} parent=5 // pred_check_branch
        %329 = sbr.rel (%p327) target = $region44
      $region43: #{tpu_custom_call.1} parent=5 // pred_region
        %s330 = ssub.s32 %s13, 2
        // Predicated region
        $region45: #{tpu_custom_call.1} parent=43 // pred_check
          %p331 = pneg %p110
        $region46: #{tpu_custom_call.1} parent=43 // pred_check_branch
          %333 = sbr.rel (%p331) target = $region48
        $region47: #{tpu_custom_call.1} parent=43 // pred_region
          %s334 = sand.u32 %s95, 1
          %s335 = scalar_lea.sflag [#allocation5], %s334
          %s336 = sand.u32 %s95, 1
          %s337 = smul.addr %s336, 8
          %s338 = scalar_lea.vmem [#allocation6], %s337
          %339 = dma.done %s335, 128
        $region48: #{tpu_custom_call.1} parent=43 // pred_fallthru
          _
      $region44: #{tpu_custom_call.1} parent=5 // pred_fallthru
        _
    $region6: #{tpu_custom_call.1} parent=1 // loop_footer
      %s17 = sadd.s32 1, %s13
    $region7: #{tpu_custom_call.1} parent=1 // loop_footer_branch
      %12 = sbr.rel target = $region3
    $region8: #{tpu_custom_call.1} parent=1 // loop_exit
      _
    %340 = vsyncpa [#allocation4], 1
    %s341 = scalar_lea.sflag [#allocation4], 1
    %342 = vsyncpa %s341, 1
    %343 = vsyncpa [#allocation5], 1
    %s344 = scalar_lea.sflag [#allocation5], 1
    %345 = vsyncpa %s344, 1

</llo_original>
